<compile_context>
chip_gen: v7x
topology: tpu7x:2x2x1
jax: 0.10.0
libtpu: 0.0.40
codegen_flags: <defaults>
</compile_context>

<pallas_src>
import functools

import jax
import jax.numpy as jnp
from jax.experimental import pallas as pl
from jax.experimental.pallas import tpu as pltpu


def _round_up(x, m):
    return ((x + m - 1) // m) * m


def _bridge_mlp_kernel(h_ref, w1_ref, w2_ref, b2_ref, mt_ref, out_ref,
                       dec_ref, m_ref, l_ref, g_ref, *, seq_len, tv):
    """One (batch tile i, vocab tile j) step of the fused BridgeMLP forward.

    h_ref  : [L, TB, Eenc] f32   encoder hidden (RNN layout, no HBM transpose)
    w1_ref : [L, Eenc, D]  bf16  bridger weight, VMEM resident across the grid
    w2_ref : [D, TV]       bf16  scorer weight, streamed per vocab tile
    b2_ref : [1, TV]       f32   fused bias tile (b1 @ w2 + b2)
    mt_ref : [TB, S]       i32   target ids where counted, -1 elsewhere
    out_ref: [TB, 1]       f32   sem_loss, written at the last vocab tile
    dec_ref: [TB, D]       bf16  scratch: bridger output for this batch tile
    m/l/g  : [TB, 1]       f32   scratch: running max / sum-exp / gathered sum
    """
    j = pl.program_id(1)
    nv = pl.num_programs(1)

    # ---- per-batch-tile init: bridger matmul + online-LSE state ------------
    @pl.when(j == 0)
    def _init():
        num_layers = h_ref.shape[0]
        acc = jnp.zeros(dec_ref.shape, jnp.float32)
        for layer in range(num_layers):          # static, tiny (enc layers)
            acc = acc + jnp.dot(h_ref[layer].astype(jnp.bfloat16),
                                w1_ref[layer],
                                preferred_element_type=jnp.float32)
        dec_ref[...] = acc.astype(jnp.bfloat16)
        m_ref[...] = jnp.full(m_ref.shape, -jnp.inf, jnp.float32)
        l_ref[...] = jnp.zeros(l_ref.shape, jnp.float32)
        g_ref[...] = jnp.zeros(g_ref.shape, jnp.float32)

    # ---- scorer matmul for this vocab tile (bf16 MXU, f32 accumulate) ------
    logits = jnp.dot(dec_ref[...], w2_ref[...],
                     preferred_element_type=jnp.float32) + b2_ref[...]

    # ---- online log-sum-exp (f32) -------------------------------------------
    m_prev = m_ref[...]
    m_new = jnp.maximum(m_prev, jnp.max(logits, axis=-1, keepdims=True))
    l_ref[...] = (jnp.exp(m_prev - m_new) * l_ref[...]
                  + jnp.sum(jnp.exp(logits - m_new), axis=-1, keepdims=True))
    m_ref[...] = m_new

    # ---- masked gather via one-hot contraction over this vocab tile --------
    # The pad mask is already fused into the ids (-1 never matches), so each
    # sequence position costs one compare + one add over [TB, TV].
    # (Static Python loop: S is a trace-time constant and dynamic lane slicing
    #  of the id column inside a fori_loop does not lower cleanly.)
    tb = logits.shape[0]
    mt = mt_ref[...]
    v_global = jax.lax.broadcasted_iota(jnp.int32, (tb, tv), 1) + j * tv
    counts = jnp.zeros((tb, tv), jnp.float32)
    for s in range(seq_len):
        counts = counts + (v_global == mt[:, s:s + 1]).astype(jnp.float32)
    g_ref[...] = g_ref[...] + jnp.sum(logits * counts, axis=-1, keepdims=True)

    # ---- finalize: loss = -(sum_masked logit - n_masked * lse) -------------
    @pl.when(j == nv - 1)
    def _finalize():
        n_masked = jnp.sum((mt >= 0).astype(jnp.float32), axis=-1,
                           keepdims=True)
        lse = m_ref[...] + jnp.log(l_ref[...])
        out_ref[...] = -(g_ref[...] - n_masked * lse)


def bridge_mlp_forward(hidden, tgt_var, params, pad_id, *, tb=128, tv=512):
    """hidden: [L, B, Eenc] f32, tgt_var: [B, S] int32 -> sem_loss [B, 1]."""
    w1, b1, w2, b2 = params
    num_layers, batch, enc_dim = hidden.shape
    e_in, d_out = w1.shape
    vocab = w2.shape[1]
    seq = tgt_var.shape[1]
    assert e_in == num_layers * enc_dim

    # ---- static tile sizes ---------------------------------------------------
    tb = min(tb, _round_up(batch, 8))        # MXU-row batch tile, >=8 sublanes
    b_pad = _round_up(batch, tb)
    tv = min(tv, _round_up(vocab, 128))      # lane-aligned vocab tile
    v_pad = _round_up(vocab, tv)
    nb, nv = b_pad // tb, v_pad // tv

    # ---- one-time parameter / input prep (cheap JAX glue) -------------------
    neg = -1e30  # padded vocab columns: exp underflows to 0, no NaN from -inf*0
    w2p = jnp.pad(w2, ((0, 0), (0, v_pad - vocab)))
    b2p = jnp.pad(b2, ((0, 0), (0, v_pad - vocab)), constant_values=neg)
    b2_fused = (b1 @ w2p + b2p).astype(jnp.float32)       # fold bridger bias
    w1_k = w1.reshape(num_layers, enc_dim, d_out).astype(jnp.bfloat16)
    w2_k = w2p.astype(jnp.bfloat16)

    h_k = jnp.pad(hidden.astype(jnp.float32),
                  ((0, 0), (0, b_pad - batch), (0, 0)))
    # fuse the pad mask into the ids: positions that do not count become -1
    mt = jnp.where(tgt_var == pad_id, tgt_var, -1).astype(jnp.int32)
    mt = jnp.pad(mt, ((0, b_pad - batch), (0, 0)), constant_values=-1)

    kernel = functools.partial(_bridge_mlp_kernel, seq_len=seq, tv=tv)
    out = pl.pallas_call(
        kernel,
        out_shape=jax.ShapeDtypeStruct((b_pad, 1), jnp.float32),
        grid_spec=pltpu.PrefetchScalarGridSpec(
            num_scalar_prefetch=0,
            grid=(nb, nv),
            in_specs=[
                pl.BlockSpec((num_layers, tb, enc_dim), lambda i, j: (0, i, 0)),
                pl.BlockSpec((num_layers, enc_dim, d_out), lambda i, j: (0, 0, 0)),
                pl.BlockSpec((d_out, tv), lambda i, j: (0, j)),
                pl.BlockSpec((1, tv), lambda i, j: (0, j)),
                pl.BlockSpec((tb, seq), lambda i, j: (i, 0)),
            ],
            out_specs=pl.BlockSpec((tb, 1), lambda i, j: (i, 0)),
            scratch_shapes=[
                pltpu.VMEM((tb, d_out), jnp.bfloat16),   # dec_init
                pltpu.VMEM((tb, 1), jnp.float32),        # running max
                pltpu.VMEM((tb, 1), jnp.float32),        # running sum-exp
                pltpu.VMEM((tb, 1), jnp.float32),        # gathered-logit sum
            ]),
        compiler_params=pltpu.CompilerParams(
            dimension_semantics=("parallel", "arbitrary")),
    )(h_k, w1_k, w2_k, b2_fused, mt)
    return out[:batch]


def bridge_mlp_reference(hidden, tgt_var, params, pad_id):
    """Pure-JAX f32 reference mirroring the PyTorch forward."""
    w1, b1, w2, b2 = params
    num_layers, batch, enc_dim = hidden.shape
    h_flat = jnp.transpose(hidden, (1, 0, 2)).reshape(batch, num_layers * enc_dim)
    dec_init = h_flat @ w1 + b1
    logits = dec_init @ w2 + b2
    logp = jax.nn.log_softmax(logits, axis=-1)
    gathered = jnp.take_along_axis(logp, tgt_var, axis=1)      # score.gather(1, tgt)
    ignore_token = (tgt_var == pad_id).astype(jnp.float32)     # tgt.eq(pad_id).float()
    return -(gathered * ignore_token).sum(axis=-1, keepdims=True)


if __name__ == "__main__":
    # Small shapes implied by the module's __init__/forward.
    ENC_LAYERS, ENC_DIM = 2, 32          # args.enc_num_layers, enc_dim
    DEC_LAYERS, DEC_HIDDEN = 2, 32       # args.dec_num_layers, dec_hidden
    VOCAB = 128                          # len(vocab.src)
    BATCH, SEQ = 2, 8
    PAD_ID = 0                           # vocab.src.pad_id

    E = ENC_LAYERS * ENC_DIM
    D = DEC_LAYERS * DEC_HIDDEN

    key = jax.random.PRNGKey(0)
    k_h, k_t, k_w1, k_b1, k_w2, k_b2 = jax.random.split(key, 6)

    hidden = jax.random.normal(k_h, (ENC_LAYERS, BATCH, ENC_DIM), jnp.float32)
    tgt_var = jax.random.randint(k_t, (BATCH, SEQ), 0, VOCAB, dtype=jnp.int32)
    # make sure some tokens are pad so the masked sum is non-trivial
    tgt_var = tgt_var.at[:, -2:].set(PAD_ID)

    # Deterministic PyTorch-style uniform(-1/sqrt(fan_in), 1/sqrt(fan_in)) init.
    def linear_init(kw, kb, fan_in, fan_out):
        bound = 1.0 / jnp.sqrt(jnp.float32(fan_in))
        w = jax.random.uniform(kw, (fan_in, fan_out), jnp.float32, -bound, bound)
        b = jax.random.uniform(kb, (1, fan_out), jnp.float32, -bound, bound)
        return w, b

    w1, b1 = linear_init(k_w1, k_b1, E, D)      # bridger.mapper
    w2, b2 = linear_init(k_w2, k_b2, D, VOCAB)  # scorer Linear
    params = (w1, b1, w2, b2)

    sem_loss = jax.block_until_ready(
        bridge_mlp_forward(hidden, tgt_var, params, PAD_ID))
    ref = bridge_mlp_reference(hidden, tgt_var, params, PAD_ID)

    assert sem_loss.shape == (BATCH, 1), sem_loss.shape
    # bf16 MXU operands vs pure-f32 reference: allow bf16-level tolerance.
    assert jnp.allclose(sem_loss, ref, atol=1e-1, rtol=1e-2), (sem_loss, ref)
    print("KERNEL_OK")
</pallas_src>

<mosaic_0001>
module attributes {stable_mosaic.version = 11 : i64} {
  func.func @_bridge_mlp_kernel(%arg0: i32, %arg1: i32, %arg2: memref<2x8x32xf32, #tpu.memory_space<vmem>>, %arg3: memref<2x32x64xbf16, #tpu.memory_space<vmem>>, %arg4: memref<64x128xbf16, #tpu.memory_space<vmem>>, %arg5: memref<1x128xf32, #tpu.memory_space<vmem>>, %arg6: memref<8x8xi32, #tpu.memory_space<vmem>>, %arg7: memref<8x1xf32, #tpu.memory_space<vmem>>, %arg8: memref<8x64xbf16, #tpu.memory_space<vmem>>, %arg9: memref<8x1xf32, #tpu.memory_space<vmem>>, %arg10: memref<8x1xf32, #tpu.memory_space<vmem>>, %arg11: memref<8x1xf32, #tpu.memory_space<vmem>>) attributes {dimension_semantics = [#tpu.dimension_semantics<parallel>, #tpu.dimension_semantics<arbitrary>], iteration_bounds = array<i64: 1, 1>, scalar_prefetch = 0 : i64, scratch_operands = 4 : i64, tpu.core_type = #tpu.core_type<tc>, window_params = [{transform_indices = @transform_0, window_bounds = array<i64: 2, 8, 32>}, {pipeline_mode = #tpu.pipeline_mode<synchronous>, transform_indices = @transform_1, window_bounds = array<i64: 2, 32, 64>}, {transform_indices = @transform_2, window_bounds = array<i64: 64, 128>}, {transform_indices = @transform_3, window_bounds = array<i64: 1, 128>}, {transform_indices = @transform_4, window_bounds = array<i64: 8, 8>}, {transform_indices = @transform_5, window_bounds = array<i64: 8, 1>}]} {
    %c0_i32 = arith.constant 0 : i32
    %0 = arith.cmpi eq, %arg1, %c0_i32 : i32
    %1 = arith.extui %0 : i1 to i32
    %c0_i32_0 = arith.constant 0 : i32
    %2 = arith.cmpi ne, %1, %c0_i32_0 : i32
    scf.if %2 {
      %cst_26 = arith.constant 0.000000e+00 : f32
      %88 = vector.broadcast %cst_26 : f32 to vector<8x64xf32>
      %c0_27 = arith.constant 0 : index
      %c0_28 = arith.constant 0 : index
      %c0_29 = arith.constant 0 : index
      %89 = vector.load %arg2[%c0_27, %c0_28, %c0_29] : memref<2x8x32xf32, #tpu.memory_space<vmem>>, vector<1x8x32xf32>
      %90 = vector.shape_cast %89 : vector<1x8x32xf32> to vector<8x32xf32>
      %91 = arith.truncf %90 : vector<8x32xf32> to vector<8x32xbf16>
      %c0_30 = arith.constant 0 : index
      %c0_31 = arith.constant 0 : index
      %c0_32 = arith.constant 0 : index
      %92 = vector.load %arg3[%c0_30, %c0_31, %c0_32] : memref<2x32x64xbf16, #tpu.memory_space<vmem>>, vector<1x32x64xbf16>
      %93 = vector.shape_cast %92 : vector<1x32x64xbf16> to vector<32x64xbf16>
      %cst_33 = arith.constant dense<0.000000e+00> : vector<8x64xf32>
      %94 = tpu.matmul %91, %93, %cst_33 {dimension_numbers = #tpu.dot_dimension_numbers<[1], [0], [0], [1], [0, 0, 1, 1], [], []>} : vector<8x32xbf16>, vector<32x64xbf16>, vector<8x64xf32> -> vector<8x64xf32>
      %95 = arith.addf %88, %94 : vector<8x64xf32>
      %c1 = arith.constant 1 : index
      %c0_34 = arith.constant 0 : index
      %c0_35 = arith.constant 0 : index
      %96 = vector.load %arg2[%c1, %c0_34, %c0_35] : memref<2x8x32xf32, #tpu.memory_space<vmem>>, vector<1x8x32xf32>
      %97 = vector.shape_cast %96 : vector<1x8x32xf32> to vector<8x32xf32>
      %98 = arith.truncf %97 : vector<8x32xf32> to vector<8x32xbf16>
      %c1_36 = arith.constant 1 : index
      %c0_37 = arith.constant 0 : index
      %c0_38 = arith.constant 0 : index
      %99 = vector.load %arg3[%c1_36, %c0_37, %c0_38] : memref<2x32x64xbf16, #tpu.memory_space<vmem>>, vector<1x32x64xbf16>
      %100 = vector.shape_cast %99 : vector<1x32x64xbf16> to vector<32x64xbf16>
      %cst_39 = arith.constant dense<0.000000e+00> : vector<8x64xf32>
      %101 = tpu.matmul %98, %100, %cst_39 {dimension_numbers = #tpu.dot_dimension_numbers<[1], [0], [0], [1], [0, 0, 1, 1], [], []>} : vector<8x32xbf16>, vector<32x64xbf16>, vector<8x64xf32> -> vector<8x64xf32>
      %102 = arith.addf %95, %101 : vector<8x64xf32>
      %103 = arith.truncf %102 : vector<8x64xf32> to vector<8x64xbf16>
      %c0_40 = arith.constant 0 : index
      %c0_41 = arith.constant 0 : index
      %104 = vector.load %arg8[%c0_40, %c0_41] : memref<8x64xbf16, #tpu.memory_space<vmem>>, vector<8x64xbf16>
      tpu.vector_store %arg8[%c0_40, %c0_41], %103 {strides = array<i32>} : memref<8x64xbf16, #tpu.memory_space<vmem>>, vector<8x64xbf16>,
      %cst_42 = arith.constant 0xFF800000 : f32
      %105 = vector.broadcast %cst_42 : f32 to vector<8x1xf32>
      %c0_43 = arith.constant 0 : index
      %c0_44 = arith.constant 0 : index
      %106 = vector.load %arg9[%c0_43, %c0_44] : memref<8x1xf32, #tpu.memory_space<vmem>>, vector<8x1xf32>
      tpu.vector_store %arg9[%c0_43, %c0_44], %105 {strides = array<i32>} : memref<8x1xf32, #tpu.memory_space<vmem>>, vector<8x1xf32>,
      %cst_45 = arith.constant 0.000000e+00 : f32
      %107 = vector.broadcast %cst_45 : f32 to vector<8x1xf32>
      %c0_46 = arith.constant 0 : index
      %c0_47 = arith.constant 0 : index
      %108 = vector.load %arg10[%c0_46, %c0_47] : memref<8x1xf32, #tpu.memory_space<vmem>>, vector<8x1xf32>
      tpu.vector_store %arg10[%c0_46, %c0_47], %107 {strides = array<i32>} : memref<8x1xf32, #tpu.memory_space<vmem>>, vector<8x1xf32>,
      %cst_48 = arith.constant 0.000000e+00 : f32
      %109 = vector.broadcast %cst_48 : f32 to vector<8x1xf32>
      %c0_49 = arith.constant 0 : index
      %c0_50 = arith.constant 0 : index
      %110 = vector.load %arg11[%c0_49, %c0_50] : memref<8x1xf32, #tpu.memory_space<vmem>>, vector<8x1xf32>
      tpu.vector_store %arg11[%c0_49, %c0_50], %109 {strides = array<i32>} : memref<8x1xf32, #tpu.memory_space<vmem>>, vector<8x1xf32>,
    } else {
    }
    %c0 = arith.constant 0 : index
    %c0_1 = arith.constant 0 : index
    %3 = vector.load %arg8[%c0, %c0_1] : memref<8x64xbf16, #tpu.memory_space<vmem>>, vector<8x64xbf16>
    %c0_2 = arith.constant 0 : index
    %c0_3 = arith.constant 0 : index
    %4 = vector.load %arg4[%c0_2, %c0_3] : memref<64x128xbf16, #tpu.memory_space<vmem>>, vector<64x128xbf16>
    %cst = arith.constant dense<0.000000e+00> : vector<8x128xf32>
    %5 = tpu.matmul %3, %4, %cst {dimension_numbers = #tpu.dot_dimension_numbers<[1], [0], [0], [1], [0, 0, 1, 1], [], []>} : vector<8x64xbf16>, vector<64x128xbf16>, vector<8x128xf32> -> vector<8x128xf32>
    %c0_4 = arith.constant 0 : index
    %c0_5 = arith.constant 0 : index
    %6 = vector.load %arg5[%c0_4, %c0_5] : memref<1x128xf32, #tpu.memory_space<vmem>>, vector<1x128xf32>
    %7 = vector.broadcast %6 : vector<1x128xf32> to vector<8x128xf32>
    %8 = arith.addf %5, %7 : vector<8x128xf32>
    %c0_6 = arith.constant 0 : index
    %c0_7 = arith.constant 0 : index
    %9 = vector.load %arg9[%c0_6, %c0_7] : memref<8x1xf32, #tpu.memory_space<vmem>>, vector<8x1xf32>
    %cst_8 = arith.constant dense<0xFF800000> : vector<8xf32>
    %10 = vector.multi_reduction <maximumf>, %8, %cst_8 [1] : vector<8x128xf32> to vector<8xf32>
    %11 = vector.shape_cast %10 : vector<8xf32> to vector<8x1xf32>
    %12 = arith.maximumf %9, %11 : vector<8x1xf32>
    %13 = arith.subf %9, %12 : vector<8x1xf32>
    %14 = math.exp %13 : vector<8x1xf32>
    %c0_9 = arith.constant 0 : index
    %c0_10 = arith.constant 0 : index
    %15 = vector.load %arg10[%c0_9, %c0_10] : memref<8x1xf32, #tpu.memory_space<vmem>>, vector<8x1xf32>
    %16 = arith.mulf %14, %15 : vector<8x1xf32>
    %17 = vector.broadcast %12 : vector<8x1xf32> to vector<8x128xf32>
    %18 = arith.subf %8, %17 : vector<8x128xf32>
    %19 = math.exp %18 : vector<8x128xf32>
    %cst_11 = arith.constant dense<0.000000e+00> : vector<8xf32>
    %20 = vector.multi_reduction <add>, %19, %cst_11 [1] : vector<8x128xf32> to vector<8xf32>
    %21 = vector.shape_cast %20 : vector<8xf32> to vector<8x1xf32>
    %22 = arith.addf %16, %21 : vector<8x1xf32>
    %c0_12 = arith.constant 0 : index
    %c0_13 = arith.constant 0 : index
    %23 = vector.load %arg10[%c0_12, %c0_13] : memref<8x1xf32, #tpu.memory_space<vmem>>, vector<8x1xf32>
    tpu.vector_store %arg10[%c0_12, %c0_13], %22 {strides = array<i32>} : memref<8x1xf32, #tpu.memory_space<vmem>>, vector<8x1xf32>,
    %c0_14 = arith.constant 0 : index
    %c0_15 = arith.constant 0 : index
    %24 = vector.load %arg9[%c0_14, %c0_15] : memref<8x1xf32, #tpu.memory_space<vmem>>, vector<8x1xf32>
    tpu.vector_store %arg9[%c0_14, %c0_15], %12 {strides = array<i32>} : memref<8x1xf32, #tpu.memory_space<vmem>>, vector<8x1xf32>,
    %c0_16 = arith.constant 0 : index
    %c0_17 = arith.constant 0 : index
    %25 = vector.load %arg6[%c0_16, %c0_17] : memref<8x8xi32, #tpu.memory_space<vmem>>, vector<8x8xi32>
    %26 = tpu.iota {dimensions = array<i32: 1>} : vector<8x128xi32>
    %c128_i32 = arith.constant 128 : i32
    %27 = arith.muli %arg1, %c128_i32 : i32
    %28 = vector.broadcast %27 : i32 to vector<8x128xi32>
    %29 = arith.addi %26, %28 : vector<8x128xi32>
    %cst_18 = arith.constant 0.000000e+00 : f32
    %30 = vector.broadcast %cst_18 : f32 to vector<8x128xf32>
    %31 = vector.extract_strided_slice %25 {offsets = [0, 0], sizes = [8, 1], strides = [1, 1]} : vector<8x8xi32> to vector<8x1xi32>
    %32 = vector.broadcast %31 : vector<8x1xi32> to vector<8x128xi32>
    %33 = arith.cmpi eq, %29, %32 : vector<8x128xi32>
    %34 = arith.extui %33 : vector<8x128xi1> to vector<8x128xi32>
    %35 = arith.sitofp %34 : vector<8x128xi32> to vector<8x128xf32>
    %36 = arith.addf %30, %35 : vector<8x128xf32>
    %37 = vector.extract_strided_slice %25 {offsets = [0, 1], sizes = [8, 1], strides = [1, 1]} : vector<8x8xi32> to vector<8x1xi32>
    %38 = vector.broadcast %37 : vector<8x1xi32> to vector<8x128xi32>
    %39 = arith.cmpi eq, %29, %38 : vector<8x128xi32>
    %40 = arith.extui %39 : vector<8x128xi1> to vector<8x128xi32>
    %41 = arith.sitofp %40 : vector<8x128xi32> to vector<8x128xf32>
    %42 = arith.addf %36, %41 : vector<8x128xf32>
    %43 = vector.extract_strided_slice %25 {offsets = [0, 2], sizes = [8, 1], strides = [1, 1]} : vector<8x8xi32> to vector<8x1xi32>
    %44 = vector.broadcast %43 : vector<8x1xi32> to vector<8x128xi32>
    %45 = arith.cmpi eq, %29, %44 : vector<8x128xi32>
    %46 = arith.extui %45 : vector<8x128xi1> to vector<8x128xi32>
    %47 = arith.sitofp %46 : vector<8x128xi32> to vector<8x128xf32>
    %48 = arith.addf %42, %47 : vector<8x128xf32>
    %49 = vector.extract_strided_slice %25 {offsets = [0, 3], sizes = [8, 1], strides = [1, 1]} : vector<8x8xi32> to vector<8x1xi32>
    %50 = vector.broadcast %49 : vector<8x1xi32> to vector<8x128xi32>
    %51 = arith.cmpi eq, %29, %50 : vector<8x128xi32>
    %52 = arith.extui %51 : vector<8x128xi1> to vector<8x128xi32>
    %53 = arith.sitofp %52 : vector<8x128xi32> to vector<8x128xf32>
    %54 = arith.addf %48, %53 : vector<8x128xf32>
    %55 = vector.extract_strided_slice %25 {offsets = [0, 4], sizes = [8, 1], strides = [1, 1]} : vector<8x8xi32> to vector<8x1xi32>
    %56 = vector.broadcast %55 : vector<8x1xi32> to vector<8x128xi32>
    %57 = arith.cmpi eq, %29, %56 : vector<8x128xi32>
    %58 = arith.extui %57 : vector<8x128xi1> to vector<8x128xi32>
    %59 = arith.sitofp %58 : vector<8x128xi32> to vector<8x128xf32>
    %60 = arith.addf %54, %59 : vector<8x128xf32>
    %61 = vector.extract_strided_slice %25 {offsets = [0, 5], sizes = [8, 1], strides = [1, 1]} : vector<8x8xi32> to vector<8x1xi32>
    %62 = vector.broadcast %61 : vector<8x1xi32> to vector<8x128xi32>
    %63 = arith.cmpi eq, %29, %62 : vector<8x128xi32>
    %64 = arith.extui %63 : vector<8x128xi1> to vector<8x128xi32>
    %65 = arith.sitofp %64 : vector<8x128xi32> to vector<8x128xf32>
    %66 = arith.addf %60, %65 : vector<8x128xf32>
    %67 = vector.extract_strided_slice %25 {offsets = [0, 6], sizes = [8, 1], strides = [1, 1]} : vector<8x8xi32> to vector<8x1xi32>
    %68 = vector.broadcast %67 : vector<8x1xi32> to vector<8x128xi32>
    %69 = arith.cmpi eq, %29, %68 : vector<8x128xi32>
    %70 = arith.extui %69 : vector<8x128xi1> to vector<8x128xi32>
    %71 = arith.sitofp %70 : vector<8x128xi32> to vector<8x128xf32>
    %72 = arith.addf %66, %71 : vector<8x128xf32>
    %73 = vector.extract_strided_slice %25 {offsets = [0, 7], sizes = [8, 1], strides = [1, 1]} : vector<8x8xi32> to vector<8x1xi32>
    %74 = vector.broadcast %73 : vector<8x1xi32> to vector<8x128xi32>
    %75 = arith.cmpi eq, %29, %74 : vector<8x128xi32>
    %76 = arith.extui %75 : vector<8x128xi1> to vector<8x128xi32>
    %77 = arith.sitofp %76 : vector<8x128xi32> to vector<8x128xf32>
    %78 = arith.addf %72, %77 : vector<8x128xf32>
    %c0_19 = arith.constant 0 : index
    %c0_20 = arith.constant 0 : index
    %79 = vector.load %arg11[%c0_19, %c0_20] : memref<8x1xf32, #tpu.memory_space<vmem>>, vector<8x1xf32>
    %80 = arith.mulf %8, %78 : vector<8x128xf32>
    %cst_21 = arith.constant dense<0.000000e+00> : vector<8xf32>
    %81 = vector.multi_reduction <add>, %80, %cst_21 [1] : vector<8x128xf32> to vector<8xf32>
    %82 = vector.shape_cast %81 : vector<8xf32> to vector<8x1xf32>
    %83 = arith.addf %79, %82 : vector<8x1xf32>
    %c0_22 = arith.constant 0 : index
    %c0_23 = arith.constant 0 : index
    %84 = vector.load %arg11[%c0_22, %c0_23] : memref<8x1xf32, #tpu.memory_space<vmem>>, vector<8x1xf32>
    tpu.vector_store %arg11[%c0_22, %c0_23], %83 {strides = array<i32>} : memref<8x1xf32, #tpu.memory_space<vmem>>, vector<8x1xf32>,
    %c0_i32_24 = arith.constant 0 : i32
    %85 = arith.cmpi eq, %arg1, %c0_i32_24 : i32
    %86 = arith.extui %85 : i1 to i32
    %c0_i32_25 = arith.constant 0 : i32
    %87 = arith.cmpi ne, %86, %c0_i32_25 : i32
    scf.if %87 {
      %c0_i32_26 = arith.constant 0 : i32
      %88 = vector.broadcast %c0_i32_26 : i32 to vector<8x8xi32>
      %89 = arith.cmpi sge, %25, %88 : vector<8x8xi32>
      %90 = arith.extui %89 : vector<8x8xi1> to vector<8x8xi32>
      %91 = arith.sitofp %90 : vector<8x8xi32> to vector<8x8xf32>
      %cst_27 = arith.constant dense<0.000000e+00> : vector<8xf32>
      %92 = vector.multi_reduction <add>, %91, %cst_27 [1] : vector<8x8xf32> to vector<8xf32>
      %93 = vector.shape_cast %92 : vector<8xf32> to vector<8x1xf32>
      %c0_28 = arith.constant 0 : index
      %c0_29 = arith.constant 0 : index
      %94 = vector.load %arg9[%c0_28, %c0_29] : memref<8x1xf32, #tpu.memory_space<vmem>>, vector<8x1xf32>
      %c0_30 = arith.constant 0 : index
      %c0_31 = arith.constant 0 : index
      %95 = vector.load %arg10[%c0_30, %c0_31] : memref<8x1xf32, #tpu.memory_space<vmem>>, vector<8x1xf32>
      %96 = math.log %95 : vector<8x1xf32>
      %97 = arith.addf %94, %96 : vector<8x1xf32>
      %c0_32 = arith.constant 0 : index
      %c0_33 = arith.constant 0 : index
      %98 = vector.load %arg11[%c0_32, %c0_33] : memref<8x1xf32, #tpu.memory_space<vmem>>, vector<8x1xf32>
      %99 = arith.mulf %93, %97 : vector<8x1xf32>
      %100 = arith.subf %98, %99 : vector<8x1xf32>
      %cst_34 = arith.constant 0.000000e+00 : f32
      %101 = vector.broadcast %cst_34 : f32 to vector<8x1xf32>
      %102 = arith.subf %101, %100 : vector<8x1xf32>
      %c0_35 = arith.constant 0 : index
      %c0_36 = arith.constant 0 : index
      %103 = vector.load %arg7[%c0_35, %c0_36] : memref<8x1xf32, #tpu.memory_space<vmem>>, vector<8x1xf32>
      tpu.vector_store %arg7[%c0_35, %c0_36], %102 {strides = array<i32>} : memref<8x1xf32, #tpu.memory_space<vmem>>, vector<8x1xf32>,
    } else {
    }
    return
  }
  func.func @transform_0(%arg0: i32, %arg1: i32) -> (i32, i32, i32) {
    %c0_i32 = arith.constant 0 : i32
    %c0_i32_0 = arith.constant 0 : i32
    %c0_i32_1 = arith.constant 0 : i32
    return %c0_i32, %arg0, %c0_i32_0 : i32, i32, i32
  }
  func.func @transform_1(%arg0: i32, %arg1: i32) -> (i32, i32, i32) {
    %c0_i32 = arith.constant 0 : i32
    %c0_i32_0 = arith.constant 0 : i32
    %c0_i32_1 = arith.constant 0 : i32
    %c0_i32_2 = arith.constant 0 : i32
    return %c0_i32, %c0_i32_0, %c0_i32_1 : i32, i32, i32
  }
  func.func @transform_2(%arg0: i32, %arg1: i32) -> (i32, i32) {
    %c0_i32 = arith.constant 0 : i32
    %c0_i32_0 = arith.constant 0 : i32
    return %c0_i32, %arg1 : i32, i32
  }
  func.func @transform_3(%arg0: i32, %arg1: i32) -> (i32, i32) {
    %c0_i32 = arith.constant 0 : i32
    %c0_i32_0 = arith.constant 0 : i32
    return %c0_i32, %arg1 : i32, i32
  }
  func.func @transform_4(%arg0: i32, %arg1: i32) -> (i32, i32) {
    %c0_i32 = arith.constant 0 : i32
    %c0_i32_0 = arith.constant 0 : i32
    return %arg0, %c0_i32 : i32, i32
  }
  func.func @transform_5(%arg0: i32, %arg1: i32) -> (i32, i32) {
    %c0_i32 = arith.constant 0 : i32
    %c0_i32_0 = arith.constant 0 : i32
    return %arg0, %c0_i32 : i32, i32
  }
}

</mosaic_0001>

<llo_original>
// kernel: tpu_custom_call.1
$region0: #{tpu_custom_call.1}
  #allocation0 [shape = 'u32[]', space=smem, size = 0x4, offset = 0x4, fixed_abs, tag = 'smem constant byte address 0x4 - core index']
  #allocation1 [shape = 'u32[144,128]{1,0:T(1,128)}', space=vmem, size = 0x12000, scoped, tag = 'internal scratch']
  #allocation2 [shape = 'bf16[8,64]{1,0:T(8,128)(2,1)}', space=vmem, size = 0x800, scoped, tag = 'scratch operand']
  #allocation3 [shape = 'f32[8,1]{1,0:T(8,128)}', space=vmem, size = 0x1000, scoped, tag = 'scratch operand']
  #allocation4 [shape = 'f32[8,1]{1,0:T(8,128)}', space=vmem, size = 0x1000, scoped, tag = 'scratch operand']
  #allocation5 [shape = 'f32[8,1]{1,0:T(8,128)}', space=vmem, size = 0x1000, scoped, tag = 'scratch operand']
  %s0 = inlined_call_operand.hbm [shape: f32[2,8,32], index: 0, kind: input, shape index: {}]
  %s1 = inlined_call_operand.hbm [shape: bf16[2,32,64], index: 1, kind: input, shape index: {}]
  %s2 = inlined_call_operand.hbm [shape: bf16[64,128], index: 2, kind: input, shape index: {}]
  %s3 = inlined_call_operand.vmem [shape: f32[1,128], index: 3, kind: input, shape index: {}]
  %s4 = inlined_call_operand.vmem [shape: s32[8,8], index: 4, kind: input, shape index: {}]
  %s5 = inlined_call_operand.vmem [shape: f32[8,1], index: 5, kind: output, shape index: {}]
  %s6 = sld [smem:[#allocation0]]
  $region50: #{tpu_custom_call.1} parent=0
    _
  %s8 = ssub.s32 1, %s6
  %s9 = scalar_select 0, %s8, %s6
  $region1: #{tpu_custom_call.1} parent=0
    #allocation6 [shape = 'u8[8192]{0}', space=vmem, size = 0x2000, scoped, tag = 'input window, operand 0, single buffered']
    #allocation7 [shape = 's32[1]{0}', space=sflag, size = 0x4, scoped, tag = 'scoped memory for tpu_custom_call.1']
    #allocation8 [shape = 'u8[16384]{0}', space=vmem, size = 0x4000, scoped, tag = 'input window, operand 1, single buffered']
    #allocation9 [shape = 's32[1]{0}', space=sflag, size = 0x4, scoped, tag = 'scoped memory for tpu_custom_call.1']
    #allocation10 [shape = 'u8[16384]{0}', space=vmem, size = 0x4000, scoped, tag = 'input window, operand 2, single buffered']
    %10 = vsyncpa [#allocation7], 0
    %11 = vsyncpa [#allocation9], 0
    // Predicated region
    $region2: #{tpu_custom_call.1} parent=1 // pred_check
      _
    $region3: #{tpu_custom_call.1} parent=1 // pred_check_branch
      %13 = sbr.rel (0) target = $region5
    $region4: #{tpu_custom_call.1} parent=1 // pred_region
      %s15 = ssub.s32 256, 256
      %16 = vsyncadd [#allocation7], %s15
      %s17 = sshll.u32 [#allocation6], 4
      %s18 = int_to_ptr.vmem [resolvable:$true] %s17
      %23 = dma.hbm_to_vmem [thread:$0]  %s0, 256, %s18, [#allocation7], 128, 128, 8
    $region5: #{tpu_custom_call.1} parent=1 // pred_fallthru
      _
    // Predicated region
    $region6: #{tpu_custom_call.1} parent=1 // pred_check
      _
    $region7: #{tpu_custom_call.1} parent=1 // pred_check_branch
      %25 = sbr.rel (0) target = $region9
    $region8: #{tpu_custom_call.1} parent=1 // pred_region
      %s27 = ssub.s32 512, 512
      %28 = vsyncadd [#allocation9], %s27
      %s29 = sshll.u32 [#allocation8], 4
      %s30 = int_to_ptr.vmem [resolvable:$true] %s29
      %35 = dma.hbm_to_vmem [thread:$0]  %s1, 512, %s30, [#allocation9], 64, 64, 4
    $region9: #{tpu_custom_call.1} parent=1 // pred_fallthru
      _
    // Predicated region
    $region10: #{tpu_custom_call.1} parent=1 // pred_check
      _
    $region11: #{tpu_custom_call.1} parent=1 // pred_check_branch
      %37 = sbr.rel (0) target = $region13
    $region12: #{tpu_custom_call.1} parent=1 // pred_region
      %s39 = ssub.s32 512, 512
      %40 = vsyncadd [#allocation9], %s39
      %s41 = sshll.u32 [#allocation10], 4
      %s42 = int_to_ptr.vmem [resolvable:$true] %s41
      %47 = dma.hbm_to_vmem [thread:$0]  %s2, 512, %s42, [#allocation9], 64, 64, 4
    $region13: #{tpu_custom_call.1} parent=1 // pred_fallthru
      _
    // Predicated region
    $region14: #{tpu_custom_call.1} parent=1 // pred_check
      _
    $region15: #{tpu_custom_call.1} parent=1 // pred_check_branch
      %49 = sbr.rel (0) target = $region17
    $region16: #{tpu_custom_call.1} parent=1 // pred_region
      _
    $region17: #{tpu_custom_call.1} parent=1 // pred_fallthru
      _
    // Predicated region
    $region18: #{tpu_custom_call.1} parent=1 // pred_check
      _
    $region19: #{tpu_custom_call.1} parent=1 // pred_check_branch
      %51 = sbr.rel (0) target = $region21
    $region20: #{tpu_custom_call.1} parent=1 // pred_region
      _
    $region21: #{tpu_custom_call.1} parent=1 // pred_fallthru
      _
    // Predicated region
    $region22: #{tpu_custom_call.1} parent=1 // pred_check
      _
    $region23: #{tpu_custom_call.1} parent=1 // pred_check_branch
      %53 = sbr.rel (0) target = $region25
    $region24: #{tpu_custom_call.1} parent=1 // pred_region
      %54 = dma.done [#allocation7], 256
    $region25: #{tpu_custom_call.1} parent=1 // pred_fallthru
      _
    // Predicated region
    $region26: #{tpu_custom_call.1} parent=1 // pred_check
      _
    $region27: #{tpu_custom_call.1} parent=1 // pred_check_branch
      %56 = sbr.rel (0) target = $region29
    $region28: #{tpu_custom_call.1} parent=1 // pred_region
      %57 = dma.done [#allocation9], 512
    $region29: #{tpu_custom_call.1} parent=1 // pred_fallthru
      _
    // Predicated region
    $region30: #{tpu_custom_call.1} parent=1 // pred_check
      _
    $region31: #{tpu_custom_call.1} parent=1 // pred_check_branch
      %59 = sbr.rel (0) target = $region33
    $region32: #{tpu_custom_call.1} parent=1 // pred_region
      %60 = dma.done [#allocation9], 512
    $region33: #{tpu_custom_call.1} parent=1 // pred_fallthru
      _
    %p62 = scmp.eq.s32.totalorder 0, 0
    // Predicated region
    $region34: #{tpu_custom_call.1} parent=1 // pred_check
      %p63 = pneg %p62
    $region35: #{tpu_custom_call.1} parent=1 // pred_check_branch
      %65 = sbr.rel (%p63) target = $region37
    $region36: #{tpu_custom_call.1} parent=1 // pred_region
      %v66 = vld [vmem:[#allocation6] sm:$0xff]
      %v67 = vpack.c.bf16 %v66, %v66
      %v68 = vld [vmem:[#allocation8] sm:$0xf]
      %v69 = vld [vmem:[#allocation8 + $0x4] sm:$0xf]
      %v70 = vld [vmem:[#allocation8 + $0x8] sm:$0xf]
      %v71 = vld [vmem:[#allocation8 + $0xc] sm:$0xf]
      %s72 = scalar_lea.vmem [#allocation6], 8
      %v73 = vld [vmem:[%s72] sm:$0xff]
      %v74 = vpack.c.bf16 %v73, %v73
      %s75 = scalar_lea.vmem [#allocation8], 16
      %v76 = vld [vmem:[%s75] sm:$0xf]
      %v77 = vld [vmem:[%s75 + $0x4] sm:$0xf]
      %v78 = vld [vmem:[%s75 + $0x8] sm:$0xf]
      %v79 = vld [vmem:[%s75 + $0xc] sm:$0xf]
      %v84 = vunpack.c.l.b16 %v76
      %v85 = vunpack.c.l.b16 %v77
      %v86 = vunpack.c.l.b16 %v78
      %v87 = vunpack.c.l.b16 %v79
      %v88 = vpack.c.b16 %v85, %v84
      %v89 = vpack.c.b16 %v87, %v86
      %vm92 = vcmask 261120
      %v94 = vsel %vm92, %v74, 0
      %96 = vmatprep.subr.bf16.mxu0 0
      %97 = vmatpush1.bf16.msra.mxu0 %v88
      %98 = vmatprep.subr.bf16.mxu0 0
      %99 = vmatpush1.bf16.msra.mxu0 %v89
      %100 = vmatprep.subr.bf16.mxu0 0
      %101 = vmatpush1.bf16.msra.mxu0 0
      %102 = vmatprep.subr.bf16.mxu0 0
      %103 = vmatpush1.bf16.msra.mxu0 0
      %104 = vmatprep.subr.bf16.mxu0 0
      %105 = vmatpush1.bf16.msra.mxu0 0
      %106 = vmatprep.subr.bf16.mxu0 0
      %107 = vmatpush1.bf16.msra.mxu0 0
      %108 = vmatprep.subr.bf16.mxu0 0
      %109 = vmatpush1.bf16.msra.mxu0 0
      %110 = vmatprep.subr.bf16.mxu0 0
      %111 = vmatpush1.bf16.msra.mxu0 0
      %112 = vmatprep.subr.bf16.mxu0 0
      %113 = vmatpush1.bf16.msra.mxu0 0
      %114 = vmatprep.subr.bf16.mxu0 0
      %115 = vmatpush1.bf16.msra.mxu0 0
      %116 = vmatprep.subr.bf16.mxu0 0
      %117 = vmatpush1.bf16.msra.mxu0 0
      %118 = vmatprep.subr.bf16.mxu0 0
      %119 = vmatpush1.bf16.msra.mxu0 0
      %120 = vmatprep.subr.bf16.mxu0 0
      %121 = vmatpush1.bf16.msra.mxu0 0
      %122 = vmatprep.subr.bf16.mxu0 0
      %123 = vmatpush1.bf16.msra.mxu0 0
      %124 = vmatprep.subr.bf16.mxu0 0
      %125 = vmatpush1.bf16.msra.mxu0 0
      %126 = vmatprep.subr.bf16.mxu0 0
      %127 = vmatpush1.bf16.msra.mxu0 0
      %128 = vmatprep.mubr.bf16.mxu0 0
      %129 = vmatmul.mubr.bf16.gmra.mrb[0].mxu0 %v94
      %v130 = vpop.f32.mrb[0].mxu0
      %v131 = vadd.f32 0.0, %v130
      %v132 = vpop.f32.mrb[0].mxu0
      %v133 = vpop.f32.mrb[0].mxu0
      %v134 = vpop.f32.mrb[0].mxu0
      %135 = vdwg.mxu0
      %v140 = vunpack.c.l.b16 %v68
      %v141 = vunpack.c.l.b16 %v69
      %v142 = vunpack.c.l.b16 %v70
      %v143 = vunpack.c.l.b16 %v71
      %v144 = vpack.c.b16 %v141, %v140
      %v145 = vpack.c.b16 %v143, %v142
      %v149 = vsel %vm92, %v67, 0
      %151 = vmatprep.subr.bf16.mxu0 0
      %152 = vmatpush1.bf16.msra.mxu0 %v144
      %153 = vmatprep.subr.bf16.mxu0 0
      %154 = vmatpush1.bf16.msra.mxu0 %v145
      %155 = vmatprep.subr.bf16.mxu0 0
      %156 = vmatpush1.bf16.msra.mxu0 0
      %157 = vmatprep.subr.bf16.mxu0 0
      %158 = vmatpush1.bf16.msra.mxu0 0
      %159 = vmatprep.subr.bf16.mxu0 0
      %160 = vmatpush1.bf16.msra.mxu0 0
      %161 = vmatprep.subr.bf16.mxu0 0
      %162 = vmatpush1.bf16.msra.mxu0 0
      %163 = vmatprep.subr.bf16.mxu0 0
      %164 = vmatpush1.bf16.msra.mxu0 0
      %165 = vmatprep.subr.bf16.mxu0 0
      %166 = vmatpush1.bf16.msra.mxu0 0
      %167 = vmatprep.subr.bf16.mxu0 0
      %168 = vmatpush1.bf16.msra.mxu0 0
      %169 = vmatprep.subr.bf16.mxu0 0
      %170 = vmatpush1.bf16.msra.mxu0 0
      %171 = vmatprep.subr.bf16.mxu0 0
      %172 = vmatpush1.bf16.msra.mxu0 0
      %173 = vmatprep.subr.bf16.mxu0 0
      %174 = vmatpush1.bf16.msra.mxu0 0
      %175 = vmatprep.subr.bf16.mxu0 0
      %176 = vmatpush1.bf16.msra.mxu0 0
      %177 = vmatprep.subr.bf16.mxu0 0
      %178 = vmatpush1.bf16.msra.mxu0 0
      %179 = vmatprep.subr.bf16.mxu0 0
      %180 = vmatpush1.bf16.msra.mxu0 0
      %181 = vmatprep.subr.bf16.mxu0 0
      %182 = vmatpush1.bf16.msra.mxu0 0
      %183 = vmatprep.mubr.bf16.mxu0 0
      %184 = vmatmul.mubr.bf16.gmra.mrb[0].mxu0 %v149
      %v185 = vpop.f32.mrb[0].mxu0
      %v186 = vadd.f32 %v131, %v185
      %v187 = vpop.f32.mrb[0].mxu0
      %v188 = vpop.f32.mrb[0].mxu0
      %v189 = vpop.f32.mrb[0].mxu0
      %190 = vdwg.mxu0
      %v191 = vpack.c.bf16 %v186, %v186
      %vm192 = vcmask 519168
      %193 = vst.msk [vmem:[#allocation2] sm:$0xf] %vm192, %v191
      %vm194 = vcmask 7168
      %195 = vst.msk [vmem:[#allocation3] sm:$0xff] %vm194, -inf
      %196 = vst.msk [vmem:[#allocation4] sm:$0xff] %vm194, 0.0
      %197 = vst.msk [vmem:[#allocation5] sm:$0xff] %vm194, 0.0
    $region37: #{tpu_custom_call.1} parent=1 // pred_fallthru
      _
    %v198 = vld [vmem:[#allocation2] sm:$0xf]
    %v199 = vld [vmem:[#allocation10] sm:$0xf]
    %v200 = vld [vmem:[#allocation10 + $0x4] sm:$0xf]
    %v201 = vld [vmem:[#allocation10 + $0x8] sm:$0xf]
    %v202 = vld [vmem:[#allocation10 + $0xc] sm:$0xf]
    %v203 = vld [vmem:[#allocation10 + $0x10] sm:$0xf]
    %v204 = vld [vmem:[#allocation10 + $0x14] sm:$0xf]
    %v205 = vld [vmem:[#allocation10 + $0x18] sm:$0xf]
    %v206 = vld [vmem:[#allocation10 + $0x1c] sm:$0xf]
    %v207 = vld [vmem:[%s3] sm:$0x1]
    %v209 = vlaneseq
    %v210 = vshrl.u32 %v209, 7
    %v211 = vsub.s32 0, %v210
    %v212 = vrot.slane %v207, %v211
    %v222 = vunpack.c.l.b16 %v199
    %v223 = vunpack.c.l.b16 %v200
    %v224 = vunpack.c.l.b16 %v201
    %v225 = vunpack.c.l.b16 %v202
    %v226 = vunpack.c.l.b16 %v203
    %v227 = vunpack.c.l.b16 %v204
    %v228 = vunpack.c.l.b16 %v205
    %v229 = vunpack.c.l.b16 %v206
    %v230 = vpack.c.b16 %v223, %v222
    %v231 = vpack.c.b16 %v225, %v224
    %v232 = vpack.c.b16 %v227, %v226
    %v233 = vpack.c.b16 %v229, %v228
    %vm238 = vcmask 523264
    %v240 = vsel %vm238, %v198, 0
    %242 = vmatprep.subr.bf16.mxu0 0
    %243 = vmatpush1.bf16.msra.mxu0 %v230
    %244 = vmatprep.subr.bf16.mxu0 0
    %245 = vmatpush1.bf16.msra.mxu0 %v231
    %246 = vmatprep.subr.bf16.mxu0 0
    %247 = vmatpush1.bf16.msra.mxu0 %v232
    %248 = vmatprep.subr.bf16.mxu0 0
    %249 = vmatpush1.bf16.msra.mxu0 %v233
    %250 = vmatprep.subr.bf16.mxu0 0
    %251 = vmatpush1.bf16.msra.mxu0 0
    %252 = vmatprep.subr.bf16.mxu0 0
    %253 = vmatpush1.bf16.msra.mxu0 0
    %254 = vmatprep.subr.bf16.mxu0 0
    %255 = vmatpush1.bf16.msra.mxu0 0
    %256 = vmatprep.subr.bf16.mxu0 0
    %257 = vmatpush1.bf16.msra.mxu0 0
    %258 = vmatprep.subr.bf16.mxu0 0
    %259 = vmatpush1.bf16.msra.mxu0 0
    %260 = vmatprep.subr.bf16.mxu0 0
    %261 = vmatpush1.bf16.msra.mxu0 0
    %262 = vmatprep.subr.bf16.mxu0 0
    %263 = vmatpush1.bf16.msra.mxu0 0
    %264 = vmatprep.subr.bf16.mxu0 0
    %265 = vmatpush1.bf16.msra.mxu0 0
    %266 = vmatprep.subr.bf16.mxu0 0
    %267 = vmatpush1.bf16.msra.mxu0 0
    %268 = vmatprep.subr.bf16.mxu0 0
    %269 = vmatpush1.bf16.msra.mxu0 0
    %270 = vmatprep.subr.bf16.mxu0 0
    %271 = vmatpush1.bf16.msra.mxu0 0
    %272 = vmatprep.subr.bf16.mxu0 0
    %273 = vmatpush1.bf16.msra.mxu0 0
    %274 = vmatprep.mubr.bf16.mxu0 0
    %275 = vmatmul.mubr.bf16.gmra.mrb[0].mxu0 %v240
    %v276 = vpop.f32.mrb[0].mxu0
    %v277 = vadd.f32 %v212, %v276
    %v278 = vpop.f32.mrb[0].mxu0
    %v279 = vpop.f32.mrb[0].mxu0
    %v280 = vpop.f32.mrb[0].mxu0
    %281 = vdwg.mxu0
    %v282 = vld [vmem:[#allocation3] sm:$0xff]
    %283 = vmax.xlane.f32.xlu0 %v277
    %v284 = vpop.xlane.xlu0 %283
    %v285 = vmax.f32 %v282, %v284
    %v286 = vsub.f32 %v282, %v285
    %v287 = vmul.f32 %v286, 1.442695
    %v288 = vpow.pop %v287
    %v289 = vld [vmem:[#allocation4] sm:$0xff]
    %v290 = vmul.f32 %v288, %v289
    %292 = vset.pattern.permute.xlu0 0
    %293 = vperm.xlu0 %292, %v285
    %v294 = vpop.permute.xlu0 %293
    %v296 = vsub.f32 %v277, %v294
    %v297 = vmul.f32 %v296, 1.442695
    %v298 = vpow.pop %v297
    %299 = vadd.xlane.f32.xlu0 %v298
    %v300 = vpop.xlane.xlu0 %299
    %v301 = vadd.f32 %v290, %v300
    %vm302 = vcmask 7168
    %303 = vst.msk [vmem:[#allocation4] sm:$0xff] %vm302, %v301
    %304 = vst.msk [vmem:[#allocation3] sm:$0xff] %vm302, %v285
    %v305 = vld [vmem:[%s4] sm:$0xff]
    %v306 = vlaneseq
    %v307 = vand.u32 %v306, 127
    %s308 = smul.u32 0, 128
    %v309 = vstv %s308
    %v310 = vadd.s32 %v307, %v309
    %311 = vset.pattern.permute.xlu0 0
    %312 = vperm.xlu0 %311, %v305
    %v313 = vpop.permute.xlu0 %312
    %vm314 = vcmp.eq.s32.totalorder %v310, %v313
    %v315 = vsel %vm314, 1, 0
    %v316 = vcvt.s32.f32 %v315
    %v317 = vadd.f32 %v316, 0.0
    %318 = vset.pattern.permute.xlu0 1
    %319 = vperm.xlu0 %318, %v305
    %v320 = vpop.permute.xlu0 %319
    %vm321 = vcmp.eq.s32.totalorder %v310, %v320
    %v322 = vsel %vm321, 1, 0
    %v323 = vcvt.s32.f32 %v322
    %v324 = vadd.f32 %v317, %v323
    %325 = vset.pattern.permute.xlu0 2
    %326 = vperm.xlu0 %325, %v305
    %v327 = vpop.permute.xlu0 %326
    %vm328 = vcmp.eq.s32.totalorder %v310, %v327
    %v329 = vsel %vm328, 1, 0
    %v330 = vcvt.s32.f32 %v329
    %v331 = vadd.f32 %v324, %v330
    %332 = vset.pattern.permute.xlu0 3
    %333 = vperm.xlu0 %332, %v305
    %v334 = vpop.permute.xlu0 %333
    %vm335 = vcmp.eq.s32.totalorder %v310, %v334
    %v336 = vsel %vm335, 1, 0
    %v337 = vcvt.s32.f32 %v336
    %v338 = vadd.f32 %v331, %v337
    %339 = vset.pattern.permute.xlu0 4
    %340 = vperm.xlu0 %339, %v305
    %v341 = vpop.permute.xlu0 %340
    %vm342 = vcmp.eq.s32.totalorder %v310, %v341
    %v343 = vsel %vm342, 1, 0
    %v344 = vcvt.s32.f32 %v343
    %v345 = vadd.f32 %v338, %v344
    %346 = vset.pattern.permute.xlu0 5
    %347 = vperm.xlu0 %346, %v305
    %v348 = vpop.permute.xlu0 %347
    %vm349 = vcmp.eq.s32.totalorder %v310, %v348
    %v350 = vsel %vm349, 1, 0
    %v351 = vcvt.s32.f32 %v350
    %v352 = vadd.f32 %v345, %v351
    %353 = vset.pattern.permute.xlu0 6
    %354 = vperm.xlu0 %353, %v305
    %v355 = vpop.permute.xlu0 %354
    %vm356 = vcmp.eq.s32.totalorder %v310, %v355
    %v357 = vsel %vm356, 1, 0
    %v358 = vcvt.s32.f32 %v357
    %v359 = vadd.f32 %v352, %v358
    %360 = vset.pattern.permute.xlu0 7
    %361 = vperm.xlu0 %360, %v305
    %v362 = vpop.permute.xlu0 %361
    %vm363 = vcmp.eq.s32.totalorder %v310, %v362
    %v364 = vsel %vm363, 1, 0
    %v365 = vcvt.s32.f32 %v364
    %v366 = vadd.f32 %v359, %v365
    %v367 = vld [vmem:[#allocation5] sm:$0xff]
    %v368 = vmul.f32 %v277, %v366
    %369 = vadd.xlane.f32.xlu0 %v368
    %v370 = vpop.xlane.xlu0 %369
    %v371 = vadd.f32 %v367, %v370
    %372 = vst.msk [vmem:[#allocation5] sm:$0xff] %vm302, %v371
    // Predicated region
    $region38: #{tpu_custom_call.1} parent=1 // pred_check
      %p373 = pneg %p62
    $region39: #{tpu_custom_call.1} parent=1 // pred_check_branch
      %375 = sbr.rel (%p373) target = $region41
    $region40: #{tpu_custom_call.1} parent=1 // pred_region
      %vm376 = vcmp.ge.s32.totalorder %v305, 0
      %v377 = vsel %vm376, 1, 0
      %v378 = vcvt.s32.f32 %v377
      %vm379 = vcmask 64512
      %v380 = vsel %vm379, %v378, 0.0
      %381 = vadd.xlane.f32.xlu0 %v380
      %v382 = vpop.xlane.xlu0 %381
      %v383 = vld [vmem:[#allocation3] sm:$0xff]
      %v384 = vld [vmem:[#allocation4] sm:$0xff]
      %v385 = vlog2.pop %v384
      %v386 = vmul.f32 %v385, 0.6931472
      %v387 = vadd.f32 %v383, %v386
      %v388 = vld [vmem:[#allocation5] sm:$0xff]
      %v389 = vmul.f32 %v382, %v387
      %v390 = vsub.f32 %v388, %v389
      %v391 = vsub.f32 0.0, %v390
      %392 = vst.msk [vmem:[%s5] sm:$0xff] %vm302, %v391
    $region41: #{tpu_custom_call.1} parent=1 // pred_fallthru
      _
    // Predicated region
    $region42: #{tpu_custom_call.1} parent=1 // pred_check
      _
    $region43: #{tpu_custom_call.1} parent=1 // pred_check_branch
      %394 = sbr.rel (0) target = $region45
    $region44: #{tpu_custom_call.1} parent=1 // pred_region
      _
    $region45: #{tpu_custom_call.1} parent=1 // pred_fallthru
      _
    // Predicated region
    $region46: #{tpu_custom_call.1} parent=1 // pred_check
      _
    $region47: #{tpu_custom_call.1} parent=1 // pred_check_branch
      %396 = sbr.rel (0) target = $region49
    $region48: #{tpu_custom_call.1} parent=1 // pred_region
      _
    $region49: #{tpu_custom_call.1} parent=1 // pred_fallthru
      _
    %397 = vsyncpa [#allocation7], 1
    %398 = vsyncpa [#allocation9], 1

</llo_original>
